<compile_context>
chip_gen: v6e
topology: v6e:2x2x1
jax: 0.10.0
libtpu: 0.0.40
codegen_flags: <defaults>
</compile_context>

<pallas_src>
import functools

import jax
import jax.numpy as jnp
from jax import lax
from jax.experimental import pallas as pl
from jax.experimental.pallas import tpu as pltpu


def _yolo_block_kernel(x_ref, masks_ref, w1_ref, t1_ref, w2_ref, t2_ref,
                       w3_ref, b3_ref, o_ref, *, H, W):
    HW = H * W

    x = x_ref[0]              # (Cin, HW)       f32 activations (one image)
    masks = masks_ref[...]    # (9*Cmid, HW)    f32 {0,1} edge masks per tap
    w1 = w1_ref[...]          # (Cmid, Cin)     bf16, BN1 scale folded in
    t1 = t1_ref[...]          # (Cmid, 1)       f32 folded BN1 shift
    w2 = w2_ref[...]          # (Cin, 9*Cmid)   bf16, BN2 scale folded in
    t2 = t2_ref[...]          # (Cin, 1)        f32 folded BN2 shift
    w3 = w3_ref[...]          # (Cout, Cin)     bf16 final 1x1 conv
    b3 = b3_ref[...]          # (Cout, 1)       f32 final conv bias

    # Static lane shifts for the 9 taps of a padding=1 3x3 conv on the
    # row-major flattened spatial axis: tap (ky,kx) reads (h+ky-1, w+kx-1).
    shifts = [(-((ky - 1) * W + (kx - 1))) % HW
              for ky in range(3) for kx in range(3)]

    def double_conv(h):       # (Cin, HW) f32 -> (Cin, HW) f32
        # 1x1 conv (channel matmul, lane-dense N=HW) + folded BN + ReLU.
        a = jnp.dot(w1, h.astype(w1.dtype), preferred_element_type=jnp.float32)
        a = jnp.maximum(a + t1, 0.0)                       # (Cmid, HW)
        # 3x3 conv, padding=1: 9 lane rotations (XLU) masked at the image
        # edges, stacked into an im2col slab -> one K = 9*Cmid MXU matmul.
        taps = [a if s == 0 else pltpu.roll(a, s, 1) for s in shifts]
        slab = jnp.concatenate(taps, axis=0) * masks       # (9*Cmid, HW) f32
        b = jnp.dot(w2, slab.astype(w2.dtype), preferred_element_type=jnp.float32)
        return jnp.maximum(b + t2, 0.0)                    # (Cin, HW)

    # The PyTorch Sequential applies the SAME _double_conv twice (shared
    # weights), then the final 1x1 conv.
    h = double_conv(double_conv(x))
    out = jnp.dot(w3, h.astype(w3.dtype), preferred_element_type=jnp.float32) + b3
    o_ref[0] = out.astype(o_ref.dtype)                     # (Cout, HW), lane-dense


def yolo_block(x, w1, t1, w2, t2, w3, b3, masks):
    """x: NCHW (N, Cin, H, W) float32. Returns NCHW (N, Cout, H, W)."""
    N, Cin, H, W = x.shape
    HW = H * W
    Cmid = w1.shape[0]
    Cout = w3.shape[0]
    # The shared double_conv module requires the 3x3 conv to map Cmid -> Cin.
    assert w1.shape == (Cmid, Cin)
    assert w2.shape == (Cin, 9 * Cmid)
    assert w3.shape == (Cout, Cin)
    assert masks.shape == (9 * Cmid, HW)
    assert HW % 128 == 0, "H*W must be a multiple of 128 for lane-dense tiles"

    x_flat = x.reshape(N, Cin, HW)          # free metadata reshape (row-major)

    def full_spec(a):
        zeros = (0,) * a.ndim
        return pl.BlockSpec(a.shape, lambda n, _z=zeros: _z)

    kernel = functools.partial(_yolo_block_kernel, H=H, W=W)

    out_flat = pl.pallas_call(
        kernel,
        out_shape=jax.ShapeDtypeStruct((N, Cout, HW), x.dtype),
        grid_spec=pltpu.PrefetchScalarGridSpec(
            num_scalar_prefetch=0,
            grid=(N,),                                   # one image per step
            in_specs=[
                pl.BlockSpec((1, Cin, HW), lambda n: (n, 0, 0)),
                full_spec(masks),
                full_spec(w1), full_spec(t1),
                full_spec(w2), full_spec(t2),
                full_spec(w3), full_spec(b3),
            ],
            out_specs=pl.BlockSpec((1, Cout, HW), lambda n: (n, 0, 0)),
        ),
        compiler_params=pltpu.CompilerParams(dimension_semantics=("parallel",)),
    )(x_flat, masks, w1, t1, w2, t2, w3, b3)

    return out_flat.reshape(N, Cout, H, W)


def prepare_yolo_params(conv1_w, conv1_b, bn1_g, bn1_b, bn1_m, bn1_v,
                        conv2_w, conv2_b, bn2_g, bn2_b, bn2_m, bn2_v,
                        conv3_w, conv3_b, H, W, eps=1e-5,
                        compute_dtype=jnp.bfloat16):
    """Fold eval-mode BN into the conv weights and build kernel-layout params."""
    Cmid, Cin = conv1_w.shape[0], conv1_w.shape[1]
    Cout = conv3_w.shape[0]

    # conv1 (1x1): (Cmid, Cin, 1, 1) -> (Cmid, Cin), BN1 scale folded in.
    s1 = bn1_g / jnp.sqrt(bn1_v + eps)
    w1 = (s1[:, None] * conv1_w[:, :, 0, 0]).astype(compute_dtype)
    t1 = (s1 * (conv1_b - bn1_m) + bn1_b).reshape(Cmid, 1).astype(jnp.float32)

    # conv2 (3x3): (Cin, Cmid, 3, 3) -> (Cin, 9*Cmid), tap-major K ordering
    # (K index = tap*Cmid + c_in with tap = ky*3 + kx), BN2 scale folded in.
    s2 = bn2_g / jnp.sqrt(bn2_v + eps)
    w2 = jnp.transpose(conv2_w, (2, 3, 0, 1)).reshape(9, Cin, Cmid)
    w2 = jnp.transpose(w2, (1, 0, 2)).reshape(Cin, 9 * Cmid)
    w2 = (s2[:, None] * w2).astype(compute_dtype)
    t2 = (s2 * (conv2_b - bn2_m) + bn2_b).reshape(Cin, 1).astype(jnp.float32)

    # conv3 (1x1): (Cout, Cin, 1, 1) -> (Cout, Cin).
    w3 = conv3_w[:, :, 0, 0].astype(compute_dtype)
    b3 = conv3_b.reshape(Cout, 1).astype(jnp.float32)

    # Validity masks for the 9 taps (zero the lanes whose shifted read would
    # fall outside the padded image), pre-expanded to (9*Cmid, H*W).
    hh = jnp.arange(H)[:, None]
    ww = jnp.arange(W)[None, :]
    mask_list = []
    for ky in range(3):
        for kx in range(3):
            dy, dx = ky - 1, kx - 1
            m = ((hh + dy >= 0) & (hh + dy < H) & (ww + dx >= 0) & (ww + dx < W))
            mask_list.append(jnp.broadcast_to(m.reshape(1, H * W), (Cmid, H * W)))
    masks = jnp.concatenate(mask_list, axis=0).astype(jnp.float32)

    return w1, t1, w2, t2, w3, b3, masks


def _reference_folded(x, w1, t1, w2, t2, w3, b3, masks):
    """Pure-JAX NCHW forward using the (folded, bf16-rounded) kernel params."""
    del masks
    N, Cin, H, W = x.shape
    Cmid = w1.shape[0]
    w1f = w1.astype(jnp.float32)
    w3f = w3.astype(jnp.float32)
    w2_oihw = w2.astype(jnp.float32).reshape(Cin, 3, 3, Cmid).transpose(0, 3, 1, 2)
    dn = ("NCHW", "OIHW", "NCHW")

    def dconv(h):
        a = jnp.einsum("oc,nchw->nohw", w1f, h) + t1.reshape(1, Cmid, 1, 1)
        a = jnp.maximum(a, 0.0)
        b = lax.conv_general_dilated(a, w2_oihw, (1, 1), [(1, 1), (1, 1)],
                                     dimension_numbers=dn)
        return jnp.maximum(b + t2.reshape(1, Cin, 1, 1), 0.0)

    h = dconv(dconv(x))
    return jnp.einsum("oc,nchw->nohw", w3f, h) + b3.reshape(1, -1, 1, 1)


def _reference_raw(x, c1w, c1b, g1, be1, m1, v1, c2w, c2b, g2, be2, m2, v2,
                   c3w, c3b, eps=1e-5):
    """Pure-JAX f32 forward from raw PyTorch-layout params (eval-mode BN)."""
    dn = ("NCHW", "OIHW", "NCHW")

    def bn(h, g, be, m, v):
        s = (g / jnp.sqrt(v + eps)).reshape(1, -1, 1, 1)
        return (h - m.reshape(1, -1, 1, 1)) * s + be.reshape(1, -1, 1, 1)

    def dconv(h):
        a = lax.conv_general_dilated(h, c1w, (1, 1), "VALID",
                                     dimension_numbers=dn) + c1b.reshape(1, -1, 1, 1)
        a = jnp.maximum(bn(a, g1, be1, m1, v1), 0.0)
        b = lax.conv_general_dilated(a, c2w, (1, 1), [(1, 1), (1, 1)],
                                     dimension_numbers=dn) + c2b.reshape(1, -1, 1, 1)
        return jnp.maximum(bn(b, g2, be2, m2, v2), 0.0)

    h = dconv(dconv(x))
    return lax.conv_general_dilated(h, c3w, (1, 1), "VALID",
                                    dimension_numbers=dn) + c3b.reshape(1, -1, 1, 1)


if __name__ == "__main__":
    N, Cin, Cout, H, W = 2, 4, 8, 16, 16
    Cmid = Cout  # mid_channels defaults to out_channels

    key = jax.random.PRNGKey(0)
    ks = jax.random.split(key, 16)

    # Deterministic synthetic parameters in PyTorch layouts.
    conv1_w = jax.random.normal(ks[0], (Cmid, Cin, 1, 1), jnp.float32) * 0.5
    conv1_b = jax.random.normal(ks[1], (Cmid,), jnp.float32) * 0.1
    bn1_g = 1.0 + 0.1 * jax.random.normal(ks[2], (Cmid,), jnp.float32)
    bn1_b = 0.1 * jax.random.normal(ks[3], (Cmid,), jnp.float32)
    bn1_m = 0.05 * jax.random.normal(ks[4], (Cmid,), jnp.float32)
    bn1_v = 1.0 + 0.1 * jnp.abs(jax.random.normal(ks[5], (Cmid,), jnp.float32))

    conv2_w = jax.random.normal(ks[6], (Cin, Cmid, 3, 3), jnp.float32) * 0.2
    conv2_b = jax.random.normal(ks[7], (Cin,), jnp.float32) * 0.1
    bn2_g = 1.0 + 0.1 * jax.random.normal(ks[8], (Cin,), jnp.float32)
    bn2_b = 0.1 * jax.random.normal(ks[9], (Cin,), jnp.float32)
    bn2_m = 0.05 * jax.random.normal(ks[10], (Cin,), jnp.float32)
    bn2_v = 1.0 + 0.1 * jnp.abs(jax.random.normal(ks[11], (Cin,), jnp.float32))

    conv3_w = jax.random.normal(ks[12], (Cout, Cin, 1, 1), jnp.float32) * 0.5
    conv3_b = jax.random.normal(ks[13], (Cout,), jnp.float32) * 0.1

    # NCHW input, exactly like the PyTorch module.
    x = jax.random.normal(ks[14], (N, Cin, H, W), jnp.float32)

    params = prepare_yolo_params(conv1_w, conv1_b, bn1_g, bn1_b, bn1_m, bn1_v,
                                 conv2_w, conv2_b, bn2_g, bn2_b, bn2_m, bn2_v,
                                 conv3_w, conv3_b, H, W)

    out = yolo_block(x, *params)
    out = jax.block_until_ready(out)
    assert out.shape == (N, Cout, H, W)

    # Kernel vs. a reference built from the same folded (bf16-rounded) params:
    # only the in-kernel bf16 activation casts differ.
    ref_folded = _reference_folded(x, *params)
    err_k = float(jnp.max(jnp.abs(out - ref_folded)))
    assert jnp.allclose(out, ref_folded, atol=2e-2, rtol=2e-2), err_k

    # Folded params vs. the raw PyTorch-semantics (eval-mode BN) forward:
    # validates the host-side BN folding / weight re-layout.
    ref_raw = _reference_raw(x, conv1_w, conv1_b, bn1_g, bn1_b, bn1_m, bn1_v,
                             conv2_w, conv2_b, bn2_g, bn2_b, bn2_m, bn2_v,
                             conv3_w, conv3_b)
    err_f = float(jnp.max(jnp.abs(ref_folded - ref_raw)))
    assert jnp.allclose(ref_folded, ref_raw, atol=3e-2, rtol=3e-2), err_f

    print("KERNEL_OK")
</pallas_src>

<mosaic_0001>
module attributes {stable_mosaic.version = 11 : i64} {
  func.func @_yolo_block_kernel(%arg0: i32, %arg1: memref<1x4x256xf32, #tpu.memory_space<vmem>>, %arg2: memref<72x256xf32, #tpu.memory_space<vmem>>, %arg3: memref<8x4xbf16, #tpu.memory_space<vmem>>, %arg4: memref<8x1xf32, #tpu.memory_space<vmem>>, %arg5: memref<4x72xbf16, #tpu.memory_space<vmem>>, %arg6: memref<4x1xf32, #tpu.memory_space<vmem>>, %arg7: memref<8x4xbf16, #tpu.memory_space<vmem>>, %arg8: memref<8x1xf32, #tpu.memory_space<vmem>>, %arg9: memref<1x8x256xf32, #tpu.memory_space<vmem>>) attributes {dimension_semantics = [#tpu.dimension_semantics<parallel>], iteration_bounds = array<i64: 2>, scalar_prefetch = 0 : i64, scratch_operands = 0 : i64, tpu.core_type = #tpu.core_type<tc>, window_params = [{transform_indices = @transform_0, window_bounds = array<i64: 1, 4, 256>}, {pipeline_mode = #tpu.pipeline_mode<synchronous>, transform_indices = @transform_1, window_bounds = array<i64: 72, 256>}, {pipeline_mode = #tpu.pipeline_mode<synchronous>, transform_indices = @transform_2, window_bounds = array<i64: 8, 4>}, {pipeline_mode = #tpu.pipeline_mode<synchronous>, transform_indices = @transform_3, window_bounds = array<i64: 8, 1>}, {pipeline_mode = #tpu.pipeline_mode<synchronous>, transform_indices = @transform_4, window_bounds = array<i64: 4, 72>}, {pipeline_mode = #tpu.pipeline_mode<synchronous>, transform_indices = @transform_5, window_bounds = array<i64: 4, 1>}, {pipeline_mode = #tpu.pipeline_mode<synchronous>, transform_indices = @transform_6, window_bounds = array<i64: 8, 4>}, {pipeline_mode = #tpu.pipeline_mode<synchronous>, transform_indices = @transform_7, window_bounds = array<i64: 8, 1>}, {transform_indices = @transform_8, window_bounds = array<i64: 1, 8, 256>}]} {
    %c0 = arith.constant 0 : index
    %c0_0 = arith.constant 0 : index
    %c0_1 = arith.constant 0 : index
    %0 = vector.load %arg1[%c0, %c0_0, %c0_1] : memref<1x4x256xf32, #tpu.memory_space<vmem>>, vector<1x4x256xf32>
    %1 = vector.shape_cast %0 : vector<1x4x256xf32> to vector<4x256xf32>
    %c0_2 = arith.constant 0 : index
    %c0_3 = arith.constant 0 : index
    %2 = vector.load %arg2[%c0_2, %c0_3] : memref<72x256xf32, #tpu.memory_space<vmem>>, vector<72x256xf32>
    %c0_4 = arith.constant 0 : index
    %c0_5 = arith.constant 0 : index
    %3 = vector.load %arg3[%c0_4, %c0_5] : memref<8x4xbf16, #tpu.memory_space<vmem>>, vector<8x4xbf16>
    %c0_6 = arith.constant 0 : index
    %c0_7 = arith.constant 0 : index
    %4 = vector.load %arg4[%c0_6, %c0_7] : memref<8x1xf32, #tpu.memory_space<vmem>>, vector<8x1xf32>
    %c0_8 = arith.constant 0 : index
    %c0_9 = arith.constant 0 : index
    %5 = vector.load %arg5[%c0_8, %c0_9] : memref<4x72xbf16, #tpu.memory_space<vmem>>, vector<4x72xbf16>
    %c0_10 = arith.constant 0 : index
    %c0_11 = arith.constant 0 : index
    %6 = vector.load %arg6[%c0_10, %c0_11] : memref<4x1xf32, #tpu.memory_space<vmem>>, vector<4x1xf32>
    %c0_12 = arith.constant 0 : index
    %c0_13 = arith.constant 0 : index
    %7 = vector.load %arg7[%c0_12, %c0_13] : memref<8x4xbf16, #tpu.memory_space<vmem>>, vector<8x4xbf16>
    %c0_14 = arith.constant 0 : index
    %c0_15 = arith.constant 0 : index
    %8 = vector.load %arg8[%c0_14, %c0_15] : memref<8x1xf32, #tpu.memory_space<vmem>>, vector<8x1xf32>
    %9 = arith.truncf %1 : vector<4x256xf32> to vector<4x256xbf16>
    %cst = arith.constant dense<0.000000e+00> : vector<8x256xf32>
    %10 = tpu.matmul %3, %9, %cst {dimension_numbers = #tpu.dot_dimension_numbers<[1], [0], [0], [1], [0, 0, 1, 1], [], []>} : vector<8x4xbf16>, vector<4x256xbf16>, vector<8x256xf32> -> vector<8x256xf32>
    %11 = vector.broadcast %4 : vector<8x1xf32> to vector<8x256xf32>
    %12 = arith.addf %10, %11 : vector<8x256xf32>
    %cst_16 = arith.constant 0.000000e+00 : f32
    %13 = vector.broadcast %cst_16 : f32 to vector<8x256xf32>
    %14 = arith.maximumf %12, %13 : vector<8x256xf32>
    %c17_i32 = arith.constant 17 : i32
    %15 = tpu.dynamic_rotate %14 by %c17_i32 dim 1 : vector<8x256xf32>, i32 -> vector<8x256xf32>
    %c16_i32 = arith.constant 16 : i32
    %16 = tpu.dynamic_rotate %14 by %c16_i32 dim 1 : vector<8x256xf32>, i32 -> vector<8x256xf32>
    %c15_i32 = arith.constant 15 : i32
    %17 = tpu.dynamic_rotate %14 by %c15_i32 dim 1 : vector<8x256xf32>, i32 -> vector<8x256xf32>
    %c1_i32 = arith.constant 1 : i32
    %18 = tpu.dynamic_rotate %14 by %c1_i32 dim 1 : vector<8x256xf32>, i32 -> vector<8x256xf32>
    %c255_i32 = arith.constant 255 : i32
    %19 = tpu.dynamic_rotate %14 by %c255_i32 dim 1 : vector<8x256xf32>, i32 -> vector<8x256xf32>
    %c241_i32 = arith.constant 241 : i32
    %20 = tpu.dynamic_rotate %14 by %c241_i32 dim 1 : vector<8x256xf32>, i32 -> vector<8x256xf32>
    %c240_i32 = arith.constant 240 : i32
    %21 = tpu.dynamic_rotate %14 by %c240_i32 dim 1 : vector<8x256xf32>, i32 -> vector<8x256xf32>
    %c239_i32 = arith.constant 239 : i32
    %22 = tpu.dynamic_rotate %14 by %c239_i32 dim 1 : vector<8x256xf32>, i32 -> vector<8x256xf32>
    %23 = tpu.concatenate %15, %16, %17, %18, %14, %19, %20, %21, %22 in 0 : vector<8x256xf32>, vector<8x256xf32>, vector<8x256xf32>, vector<8x256xf32>, vector<8x256xf32>, vector<8x256xf32>, vector<8x256xf32>, vector<8x256xf32>, vector<8x256xf32> -> vector<72x256xf32>
    %24 = arith.mulf %23, %2 : vector<72x256xf32>
    %25 = arith.truncf %24 : vector<72x256xf32> to vector<72x256xbf16>
    %cst_17 = arith.constant dense<0.000000e+00> : vector<4x256xf32>
    %26 = tpu.matmul %5, %25, %cst_17 {dimension_numbers = #tpu.dot_dimension_numbers<[1], [0], [0], [1], [0, 0, 1, 1], [], []>} : vector<4x72xbf16>, vector<72x256xbf16>, vector<4x256xf32> -> vector<4x256xf32>
    %27 = vector.broadcast %6 : vector<4x1xf32> to vector<4x256xf32>
    %28 = arith.addf %26, %27 : vector<4x256xf32>
    %cst_18 = arith.constant 0.000000e+00 : f32
    %29 = vector.broadcast %cst_18 : f32 to vector<4x256xf32>
    %30 = arith.maximumf %28, %29 : vector<4x256xf32>
    %31 = arith.truncf %30 : vector<4x256xf32> to vector<4x256xbf16>
    %cst_19 = arith.constant dense<0.000000e+00> : vector<8x256xf32>
    %32 = tpu.matmul %3, %31, %cst_19 {dimension_numbers = #tpu.dot_dimension_numbers<[1], [0], [0], [1], [0, 0, 1, 1], [], []>} : vector<8x4xbf16>, vector<4x256xbf16>, vector<8x256xf32> -> vector<8x256xf32>
    %33 = vector.broadcast %4 : vector<8x1xf32> to vector<8x256xf32>
    %34 = arith.addf %32, %33 : vector<8x256xf32>
    %cst_20 = arith.constant 0.000000e+00 : f32
    %35 = vector.broadcast %cst_20 : f32 to vector<8x256xf32>
    %36 = arith.maximumf %34, %35 : vector<8x256xf32>
    %c17_i32_21 = arith.constant 17 : i32
    %37 = tpu.dynamic_rotate %36 by %c17_i32_21 dim 1 : vector<8x256xf32>, i32 -> vector<8x256xf32>
    %c16_i32_22 = arith.constant 16 : i32
    %38 = tpu.dynamic_rotate %36 by %c16_i32_22 dim 1 : vector<8x256xf32>, i32 -> vector<8x256xf32>
    %c15_i32_23 = arith.constant 15 : i32
    %39 = tpu.dynamic_rotate %36 by %c15_i32_23 dim 1 : vector<8x256xf32>, i32 -> vector<8x256xf32>
    %c1_i32_24 = arith.constant 1 : i32
    %40 = tpu.dynamic_rotate %36 by %c1_i32_24 dim 1 : vector<8x256xf32>, i32 -> vector<8x256xf32>
    %c255_i32_25 = arith.constant 255 : i32
    %41 = tpu.dynamic_rotate %36 by %c255_i32_25 dim 1 : vector<8x256xf32>, i32 -> vector<8x256xf32>
    %c241_i32_26 = arith.constant 241 : i32
    %42 = tpu.dynamic_rotate %36 by %c241_i32_26 dim 1 : vector<8x256xf32>, i32 -> vector<8x256xf32>
    %c240_i32_27 = arith.constant 240 : i32
    %43 = tpu.dynamic_rotate %36 by %c240_i32_27 dim 1 : vector<8x256xf32>, i32 -> vector<8x256xf32>
    %c239_i32_28 = arith.constant 239 : i32
    %44 = tpu.dynamic_rotate %36 by %c239_i32_28 dim 1 : vector<8x256xf32>, i32 -> vector<8x256xf32>
    %45 = tpu.concatenate %37, %38, %39, %40, %36, %41, %42, %43, %44 in 0 : vector<8x256xf32>, vector<8x256xf32>, vector<8x256xf32>, vector<8x256xf32>, vector<8x256xf32>, vector<8x256xf32>, vector<8x256xf32>, vector<8x256xf32>, vector<8x256xf32> -> vector<72x256xf32>
    %46 = arith.mulf %45, %2 : vector<72x256xf32>
    %47 = arith.truncf %46 : vector<72x256xf32> to vector<72x256xbf16>
    %cst_29 = arith.constant dense<0.000000e+00> : vector<4x256xf32>
    %48 = tpu.matmul %5, %47, %cst_29 {dimension_numbers = #tpu.dot_dimension_numbers<[1], [0], [0], [1], [0, 0, 1, 1], [], []>} : vector<4x72xbf16>, vector<72x256xbf16>, vector<4x256xf32> -> vector<4x256xf32>
    %49 = vector.broadcast %6 : vector<4x1xf32> to vector<4x256xf32>
    %50 = arith.addf %48, %49 : vector<4x256xf32>
    %cst_30 = arith.constant 0.000000e+00 : f32
    %51 = vector.broadcast %cst_30 : f32 to vector<4x256xf32>
    %52 = arith.maximumf %50, %51 : vector<4x256xf32>
    %53 = arith.truncf %52 : vector<4x256xf32> to vector<4x256xbf16>
    %cst_31 = arith.constant dense<0.000000e+00> : vector<8x256xf32>
    %54 = tpu.matmul %7, %53, %cst_31 {dimension_numbers = #tpu.dot_dimension_numbers<[1], [0], [0], [1], [0, 0, 1, 1], [], []>} : vector<8x4xbf16>, vector<4x256xbf16>, vector<8x256xf32> -> vector<8x256xf32>
    %55 = vector.broadcast %8 : vector<8x1xf32> to vector<8x256xf32>
    %56 = arith.addf %54, %55 : vector<8x256xf32>
    %c0_32 = arith.constant 0 : index
    %c0_33 = arith.constant 0 : index
    %c0_34 = arith.constant 0 : index
    %57 = vector.load %arg9[%c0_32, %c0_33, %c0_34] : memref<1x8x256xf32, #tpu.memory_space<vmem>>, vector<1x8x256xf32>
    %58 = vector.shape_cast %57 : vector<1x8x256xf32> to vector<8x256xf32>
    %59 = vector.shape_cast %56 : vector<8x256xf32> to vector<1x8x256xf32>
    tpu.vector_store %arg9[%c0_32, %c0_33, %c0_34], %59 {strides = array<i32>} : memref<1x8x256xf32, #tpu.memory_space<vmem>>, vector<1x8x256xf32>,
    return
  }
  func.func @transform_0(%arg0: i32) -> (i32, i32, i32) {
    %c0_i32 = arith.constant 0 : i32
    %c0_i32_0 = arith.constant 0 : i32
    %c0_i32_1 = arith.constant 0 : i32
    return %arg0, %c0_i32, %c0_i32_0 : i32, i32, i32
  }
  func.func @transform_1(%arg0: i32) -> (i32, i32) {
    %c0_i32 = arith.constant 0 : i32
    %c0_i32_0 = arith.constant 0 : i32
    %c0_i32_1 = arith.constant 0 : i32
    return %c0_i32, %c0_i32_0 : i32, i32
  }
  func.func @transform_2(%arg0: i32) -> (i32, i32) {
    %c0_i32 = arith.constant 0 : i32
    %c0_i32_0 = arith.constant 0 : i32
    %c0_i32_1 = arith.constant 0 : i32
    return %c0_i32, %c0_i32_0 : i32, i32
  }
  func.func @transform_3(%arg0: i32) -> (i32, i32) {
    %c0_i32 = arith.constant 0 : i32
    %c0_i32_0 = arith.constant 0 : i32
    %c0_i32_1 = arith.constant 0 : i32
    return %c0_i32, %c0_i32_0 : i32, i32
  }
  func.func @transform_4(%arg0: i32) -> (i32, i32) {
    %c0_i32 = arith.constant 0 : i32
    %c0_i32_0 = arith.constant 0 : i32
    %c0_i32_1 = arith.constant 0 : i32
    return %c0_i32, %c0_i32_0 : i32, i32
  }
  func.func @transform_5(%arg0: i32) -> (i32, i32) {
    %c0_i32 = arith.constant 0 : i32
    %c0_i32_0 = arith.constant 0 : i32
    %c0_i32_1 = arith.constant 0 : i32
    return %c0_i32, %c0_i32_0 : i32, i32
  }
  func.func @transform_6(%arg0: i32) -> (i32, i32) {
    %c0_i32 = arith.constant 0 : i32
    %c0_i32_0 = arith.constant 0 : i32
    %c0_i32_1 = arith.constant 0 : i32
    return %c0_i32, %c0_i32_0 : i32, i32
  }
  func.func @transform_7(%arg0: i32) -> (i32, i32) {
    %c0_i32 = arith.constant 0 : i32
    %c0_i32_0 = arith.constant 0 : i32
    %c0_i32_1 = arith.constant 0 : i32
    return %c0_i32, %c0_i32_0 : i32, i32
  }
  func.func @transform_8(%arg0: i32) -> (i32, i32, i32) {
    %c0_i32 = arith.constant 0 : i32
    %c0_i32_0 = arith.constant 0 : i32
    %c0_i32_1 = arith.constant 0 : i32
    return %arg0, %c0_i32, %c0_i32_0 : i32, i32, i32
  }
}

</mosaic_0001>

<llo_original>
// kernel: tpu_custom_call.1
$region0: #{tpu_custom_call.1}
  #allocation0 [shape = 'u32[]', space=smem, size = 0x4, offset = 0x4, fixed_abs, tag = 'smem constant byte address 0x4 - core index']
  #allocation1 [shape = 'u32[144,128]{1,0:T(1,128)}', space=vmem, size = 0x12000, scoped, tag = 'internal scratch']
  %s0 = inlined_call_operand.vmem [shape: f32[2,4,256], index: 0, kind: input, shape index: {}]
  %s1 = inlined_call_operand.hbm [shape: f32[72,256], index: 1, kind: input, shape index: {}]
  %s2 = inlined_call_operand.vmem [shape: bf16[8,4], index: 2, kind: input, shape index: {}]
  %s3 = inlined_call_operand.vmem [shape: f32[8,1], index: 3, kind: input, shape index: {}]
  %s4 = inlined_call_operand.vmem [shape: bf16[4,72], index: 4, kind: input, shape index: {}]
  %s5 = inlined_call_operand.vmem [shape: f32[4,1], index: 5, kind: input, shape index: {}]
  %s6 = inlined_call_operand.vmem [shape: bf16[8,4], index: 6, kind: input, shape index: {}]
  %s7 = inlined_call_operand.vmem [shape: f32[8,1], index: 7, kind: input, shape index: {}]
  %s8 = inlined_call_operand.hbm [shape: f32[2,8,256], index: 8, kind: output, shape index: {}]
  %s9 = sld [smem:[#allocation0]]
  $region69: #{tpu_custom_call.1} parent=0
    _
  %s11 = ssub.s32 1, %s9
  %s12 = scalar_select 0, %s11, %s9
  $region1: #{tpu_custom_call.1} parent=0
    #allocation2 [shape = 'u8[73728]{0}', space=vmem, size = 0x12000, scoped, tag = 'input window, operand 1, single buffered']
    #allocation3 [shape = 's32[2]{0}', space=sflag, size = 0x8, scoped, tag = 'scoped memory for tpu_custom_call.1']
    #allocation4 [shape = 's32[2]{0}', space=sflag, size = 0x8, scoped, tag = 'scoped memory for tpu_custom_call.1']
    #allocation5 [shape = 'u8[16384]{0}', space=vmem, size = 0x4000, scoped, tag = 'output window, operand 0']
    %13 = vsyncpa [#allocation3], 0
    %14 = vsyncpa [#allocation4], 0
    %s15 = scalar_lea.sflag [#allocation4], 1
    %16 = vsyncpa %s15, 0
    loop: start=0, step=1, limit=4
    $region2: #{tpu_custom_call.1} parent=1 // loop_pre_header
      _
    $region3: #{tpu_custom_call.1} parent=1 // loop_header
      %s18 = sphi 0, %s22
      %p19 = scmp.ge.s32.totalorder %s18, 4
      %s28 = sphi 0, %s30
      %s31 = sphi 0, %s28
      %s32 = sphi 0, %s31
      %s48 = sphi 0, %s32
      %s52 = sphi 0, %s52
      %s54 = sphi 0, %s52
      %s55 = sphi 0, %s54
      %s69 = sphi 0, %s55
      %s73 = sphi 0, %s73
      %s75 = sphi 0, %s73
      %s76 = sphi 0, %s75
      %s90 = sphi 0, %s76
      %s94 = sphi 0, %s94
      %s96 = sphi 0, %s94
      %s97 = sphi 0, %s96
      %s111 = sphi 0, %s97
      %s115 = sphi 0, %s115
      %s117 = sphi 0, %s115
      %s118 = sphi 0, %s117
      %s132 = sphi 0, %s118
      %s136 = sphi 0, %s136
      %s138 = sphi 0, %s136
      %s139 = sphi 0, %s138
      %s153 = sphi 0, %s139
      %s157 = sphi 0, %s157
      %s159 = sphi 0, %s157
      %s160 = sphi 0, %s159
      %s174 = sphi 0, %s160
      %s178 = sphi 0, %s178
      %s180 = sphi 0, %s178
      %s181 = sphi 0, %s180
      %s195 = sphi 0, %s181
      %s201 = sphi 0, %s203
      %s204 = sphi 0, %s201
      %s205 = sphi 0, %s204
      %s221 = sphi 0, %s205
    $region4: #{tpu_custom_call.1} parent=1 // loop_header_branch
      %21 = sbr.rel (%p19) target = $region8
    $region5: #{tpu_custom_call.1} parent=1 // loop_body
      %s23 = ssub.s32 %s18, 1
      %s24 = ssub.s32 %s18, 2
      %s25 = sadd.s32 %s18, 1
      %s26 = ssub.s32 %s18, %s25
      %p27 = scmp.eq.s32.totalorder %s26, 0
      %s29 = sadd.s32 %s28, 1
      %s30 = scalar_select %p27, %s28, %s29
      %p33 = pneg %p27
      %p34 = scmp.eq.s32.totalorder %s18, 1
      %p35 = por %p33, %p34
      %p36 = scmp.ne.s32.totalorder %s28, %s31
      %p37 = scmp.eq.s32.totalorder %s18, 0
      %p38 = por %p36, %p37
      %p39 = scmp.ne.s32.totalorder %s28, %s31
      %p40 = scmp.eq.s32.totalorder %s23, 1
      %p41 = por %p39, %p40
      %p42 = scmp.ne.s32.totalorder %s31, %s32
      %p43 = scmp.eq.s32.totalorder %s23, 0
      %p44 = por %p42, %p43
      %p45 = scmp.ne.s32.totalorder %s31, %s32
      %p46 = scmp.eq.s32.totalorder %s24, 1
      %p47 = por %p45, %p46
      %p49 = scmp.ne.s32.totalorder %s32, %s48
      %p50 = scmp.eq.s32.totalorder %s24, 0
      %p51 = por %p49, %p50
      %s53 = sadd.s32 %s52, 1
      %p56 = scmp.eq.s32.totalorder %s18, 1
      %p57 = scmp.ne.s32.totalorder %s52, %s54
      %p58 = scmp.eq.s32.totalorder %s18, 0
      %p59 = por %p57, %p58
      %p60 = scmp.ne.s32.totalorder %s52, %s54
      %p61 = scmp.eq.s32.totalorder %s23, 1
      %p62 = por %p60, %p61
      %p63 = scmp.ne.s32.totalorder %s54, %s55
      %p64 = scmp.eq.s32.totalorder %s23, 0
      %p65 = por %p63, %p64
      %p66 = scmp.ne.s32.totalorder %s54, %s55
      %p67 = scmp.eq.s32.totalorder %s24, 1
      %p68 = por %p66, %p67
      %p70 = scmp.ne.s32.totalorder %s55, %s69
      %p71 = scmp.eq.s32.totalorder %s24, 0
      %p72 = por %p70, %p71
      %s74 = sadd.s32 %s73, 1
      %p77 = scmp.eq.s32.totalorder %s18, 1
      %p78 = scmp.ne.s32.totalorder %s73, %s75
      %p79 = scmp.eq.s32.totalorder %s18, 0
      %p80 = por %p78, %p79
      %p81 = scmp.ne.s32.totalorder %s73, %s75
      %p82 = scmp.eq.s32.totalorder %s23, 1
      %p83 = por %p81, %p82
      %p84 = scmp.ne.s32.totalorder %s75, %s76
      %p85 = scmp.eq.s32.totalorder %s23, 0
      %p86 = por %p84, %p85
      %p87 = scmp.ne.s32.totalorder %s75, %s76
      %p88 = scmp.eq.s32.totalorder %s24, 1
      %p89 = por %p87, %p88
      %p91 = scmp.ne.s32.totalorder %s76, %s90
      %p92 = scmp.eq.s32.totalorder %s24, 0
      %p93 = por %p91, %p92
      %s95 = sadd.s32 %s94, 1
      %p98 = scmp.eq.s32.totalorder %s18, 1
      %p99 = scmp.ne.s32.totalorder %s94, %s96
      %p100 = scmp.eq.s32.totalorder %s18, 0
      %p101 = por %p99, %p100
      %p102 = scmp.ne.s32.totalorder %s94, %s96
      %p103 = scmp.eq.s32.totalorder %s23, 1
      %p104 = por %p102, %p103
      %p105 = scmp.ne.s32.totalorder %s96, %s97
      %p106 = scmp.eq.s32.totalorder %s23, 0
      %p107 = por %p105, %p106
      %p108 = scmp.ne.s32.totalorder %s96, %s97
      %p109 = scmp.eq.s32.totalorder %s24, 1
      %p110 = por %p108, %p109
      %p112 = scmp.ne.s32.totalorder %s97, %s111
      %p113 = scmp.eq.s32.totalorder %s24, 0
      %p114 = por %p112, %p113
      %s116 = sadd.s32 %s115, 1
      %p119 = scmp.eq.s32.totalorder %s18, 1
      %p120 = scmp.ne.s32.totalorder %s115, %s117
      %p121 = scmp.eq.s32.totalorder %s18, 0
      %p122 = por %p120, %p121
      %p123 = scmp.ne.s32.totalorder %s115, %s117
      %p124 = scmp.eq.s32.totalorder %s23, 1
      %p125 = por %p123, %p124
      %p126 = scmp.ne.s32.totalorder %s117, %s118
      %p127 = scmp.eq.s32.totalorder %s23, 0
      %p128 = por %p126, %p127
      %p129 = scmp.ne.s32.totalorder %s117, %s118
      %p130 = scmp.eq.s32.totalorder %s24, 1
      %p131 = por %p129, %p130
      %p133 = scmp.ne.s32.totalorder %s118, %s132
      %p134 = scmp.eq.s32.totalorder %s24, 0
      %p135 = por %p133, %p134
      %s137 = sadd.s32 %s136, 1
      %p140 = scmp.eq.s32.totalorder %s18, 1
      %p141 = scmp.ne.s32.totalorder %s136, %s138
      %p142 = scmp.eq.s32.totalorder %s18, 0
      %p143 = por %p141, %p142
      %p144 = scmp.ne.s32.totalorder %s136, %s138
      %p145 = scmp.eq.s32.totalorder %s23, 1
      %p146 = por %p144, %p145
      %p147 = scmp.ne.s32.totalorder %s138, %s139
      %p148 = scmp.eq.s32.totalorder %s23, 0
      %p149 = por %p147, %p148
      %p150 = scmp.ne.s32.totalorder %s138, %s139
      %p151 = scmp.eq.s32.totalorder %s24, 1
      %p152 = por %p150, %p151
      %p154 = scmp.ne.s32.totalorder %s139, %s153
      %p155 = scmp.eq.s32.totalorder %s24, 0
      %p156 = por %p154, %p155
      %s158 = sadd.s32 %s157, 1
      %p161 = scmp.eq.s32.totalorder %s18, 1
      %p162 = scmp.ne.s32.totalorder %s157, %s159
      %p163 = scmp.eq.s32.totalorder %s18, 0
      %p164 = por %p162, %p163
      %p165 = scmp.ne.s32.totalorder %s157, %s159
      %p166 = scmp.eq.s32.totalorder %s23, 1
      %p167 = por %p165, %p166
      %p168 = scmp.ne.s32.totalorder %s159, %s160
      %p169 = scmp.eq.s32.totalorder %s23, 0
      %p170 = por %p168, %p169
      %p171 = scmp.ne.s32.totalorder %s159, %s160
      %p172 = scmp.eq.s32.totalorder %s24, 1
      %p173 = por %p171, %p172
      %p175 = scmp.ne.s32.totalorder %s160, %s174
      %p176 = scmp.eq.s32.totalorder %s24, 0
      %p177 = por %p175, %p176
      %s179 = sadd.s32 %s178, 1
      %p182 = scmp.eq.s32.totalorder %s18, 1
      %p183 = scmp.ne.s32.totalorder %s178, %s180
      %p184 = scmp.eq.s32.totalorder %s18, 0
      %p185 = por %p183, %p184
      %p186 = scmp.ne.s32.totalorder %s178, %s180
      %p187 = scmp.eq.s32.totalorder %s23, 1
      %p188 = por %p186, %p187
      %p189 = scmp.ne.s32.totalorder %s180, %s181
      %p190 = scmp.eq.s32.totalorder %s23, 0
      %p191 = por %p189, %p190
      %p192 = scmp.ne.s32.totalorder %s180, %s181
      %p193 = scmp.eq.s32.totalorder %s24, 1
      %p194 = por %p192, %p193
      %p196 = scmp.ne.s32.totalorder %s181, %s195
      %p197 = scmp.eq.s32.totalorder %s24, 0
      %p198 = por %p196, %p197
      %s199 = ssub.s32 %s18, %s25
      %p200 = scmp.eq.s32.totalorder %s199, 0
      %s202 = sadd.s32 %s201, 1
      %s203 = scalar_select %p200, %s201, %s202
      %p206 = pneg %p200
      %p207 = scmp.eq.s32.totalorder %s18, 1
      %p208 = por %p206, %p207
      %p209 = scmp.ne.s32.totalorder %s201, %s204
      %p210 = scmp.eq.s32.totalorder %s18, 0
      %p211 = por %p209, %p210
      %p212 = scmp.ne.s32.totalorder %s201, %s204
      %p213 = scmp.eq.s32.totalorder %s23, 1
      %p214 = por %p212, %p213
      %p215 = scmp.ne.s32.totalorder %s204, %s205
      %p216 = scmp.eq.s32.totalorder %s23, 0
      %p217 = por %p215, %p216
      %p218 = scmp.ne.s32.totalorder %s204, %s205
      %p219 = scmp.eq.s32.totalorder %s24, 1
      %p220 = por %p218, %p219
      %p222 = scmp.ne.s32.totalorder %s205, %s221
      %p223 = scmp.eq.s32.totalorder %s24, 0
      %p224 = por %p222, %p223
      %p225 = scmp.le.s32.totalorder 1, %s18
      %p226 = scmp.lt.s32.totalorder %s18, 3
      %p227 = pnand %p225, %p226
      %p228 = pneg %p227
      // Predicated region
      $region9: #{tpu_custom_call.1} parent=5 // pred_check
        _
      $region10: #{tpu_custom_call.1} parent=5 // pred_check_branch
        %230 = sbr.rel (%p227) target = $region12
      $region11: #{tpu_custom_call.1} parent=5 // pred_region
        %s231 = ssub.s32 %s18, 1
        // Predicated region
        $region13: #{tpu_custom_call.1} parent=11 // pred_check
          %p232 = pneg %p65
        $region14: #{tpu_custom_call.1} parent=11 // pred_check_branch
          %234 = sbr.rel (%p232) target = $region16
        $region15: #{tpu_custom_call.1} parent=11 // pred_region
          %s236 = ssub.s32 2304, 2304
          %237 = vsyncadd [#allocation3], %s236
          %s238 = sshll.u32 [#allocation2], 4
          %s239 = int_to_ptr.vmem [resolvable:$true] %s238
          %244 = dma.hbm_to_vmem [thread:$0]  %s1, 2304, %s239, [#allocation3], 256, 256, 16
        $region16: #{tpu_custom_call.1} parent=11 // pred_fallthru
          _
        // Predicated region
        $region17: #{tpu_custom_call.1} parent=11 // pred_check
          %p245 = pneg %p86
        $region18: #{tpu_custom_call.1} parent=11 // pred_check_branch
          %247 = sbr.rel (%p245) target = $region20
        $region19: #{tpu_custom_call.1} parent=11 // pred_region
          _
        $region20: #{tpu_custom_call.1} parent=11 // pred_fallthru
          _
        // Predicated region
        $region21: #{tpu_custom_call.1} parent=11 // pred_check
          %p248 = pneg %p107
        $region22: #{tpu_custom_call.1} parent=11 // pred_check_branch
          %250 = sbr.rel (%p248) target = $region24
        $region23: #{tpu_custom_call.1} parent=11 // pred_region
          _
        $region24: #{tpu_custom_call.1} parent=11 // pred_fallthru
          _
        // Predicated region
        $region25: #{tpu_custom_call.1} parent=11 // pred_check
          %p251 = pneg %p128
        $region26: #{tpu_custom_call.1} parent=11 // pred_check_branch
          %253 = sbr.rel (%p251) target = $region28
        $region27: #{tpu_custom_call.1} parent=11 // pred_region
          _
        $region28: #{tpu_custom_call.1} parent=11 // pred_fallthru
          _
        // Predicated region
        $region29: #{tpu_custom_call.1} parent=11 // pred_check
          %p254 = pneg %p149
        $region30: #{tpu_custom_call.1} parent=11 // pred_check_branch
          %256 = sbr.rel (%p254) target = $region32
        $region31: #{tpu_custom_call.1} parent=11 // pred_region
          _
        $region32: #{tpu_custom_call.1} parent=11 // pred_fallthru
          _
        // Predicated region
        $region33: #{tpu_custom_call.1} parent=11 // pred_check
          %p257 = pneg %p170
        $region34: #{tpu_custom_call.1} parent=11 // pred_check_branch
          %259 = sbr.rel (%p257) target = $region36
        $region35: #{tpu_custom_call.1} parent=11 // pred_region
          _
        $region36: #{tpu_custom_call.1} parent=11 // pred_fallthru
          _
        // Predicated region
        $region37: #{tpu_custom_call.1} parent=11 // pred_check
          %p260 = pneg %p191
        $region38: #{tpu_custom_call.1} parent=11 // pred_check_branch
          %262 = sbr.rel (%p260) target = $region40
        $region39: #{tpu_custom_call.1} parent=11 // pred_region
          _
        $region40: #{tpu_custom_call.1} parent=11 // pred_fallthru
          _
      $region12: #{tpu_custom_call.1} parent=5 // pred_fallthru
        _
      %p263 = scmp.lt.s32.totalorder %s18, 2
      // Predicated region
      $region41: #{tpu_custom_call.1} parent=5 // pred_check
        %p264 = pneg %p263
      $region42: #{tpu_custom_call.1} parent=5 // pred_check_branch
        %266 = sbr.rel (%p264) target = $region44
      $region43: #{tpu_custom_call.1} parent=5 // pred_region
        // Predicated region
        $region45: #{tpu_custom_call.1} parent=43 // pred_check
          %p267 = pneg %p38
        $region46: #{tpu_custom_call.1} parent=43 // pred_check_branch
          %269 = sbr.rel (%p267) target = $region48
        $region47: #{tpu_custom_call.1} parent=43 // pred_region
          %p270 = scmp.lt.s32.totalorder %s18, 1
          %s271 = scalar_select %p270, %s18, 1
          %s272 = smul.addr %s271, 2
          %s273 = smul.addr %s272, 4
          %s274 = scalar_lea.vmem %s0, %s273
        $region48: #{tpu_custom_call.1} parent=43 // pred_fallthru
          _
      $region44: #{tpu_custom_call.1} parent=5 // pred_fallthru
        _
      %p275 = scmp.le.s32.totalorder 1, %s18
      %p276 = scmp.lt.s32.totalorder %s18, 3
      %p277 = pnand %p275, %p276
      %p278 = pneg %p277
      // Predicated region
      $region49: #{tpu_custom_call.1} parent=5 // pred_check
        _
      $region50: #{tpu_custom_call.1} parent=5 // pred_check_branch
        %280 = sbr.rel (%p277) target = $region52
      $region51: #{tpu_custom_call.1} parent=5 // pred_region
        %s281 = ssub.s32 %s18, 1
        // Predicated region
        $region53: #{tpu_custom_call.1} parent=51 // pred_check
          %p282 = pneg %p65
        $region54: #{tpu_custom_call.1} parent=51 // pred_check_branch
          %284 = sbr.rel (%p282) target = $region56
        $region55: #{tpu_custom_call.1} parent=51 // pred_region
          %285 = dma.done [#allocation3], 2304
        $region56: #{tpu_custom_call.1} parent=51 // pred_fallthru
          _
        %p286 = scmp.lt.s32.totalorder %s23, 1
        %s287 = scalar_select %p286, %s23, 1
        %s288 = smul.addr %s287, 2
        %s289 = smul.addr %s288, 4
        %s290 = scalar_lea.vmem %s0, %s289
        %p291 = pneg %p44
        %p292 = pneg %p41
        %p293 = pneg %p65
        %p294 = pneg %p62
        %p295 = pneg %p86
        %p296 = pneg %p83
        %p297 = pneg %p107
        %p298 = pneg %p104
        %p299 = pneg %p128
        %p300 = pneg %p125
        %p301 = pneg %p149
        %p302 = pneg %p146
        %p303 = pneg %p170
        %p304 = pneg %p167
        %p305 = pneg %p191
        %p306 = pneg %p188
        %p307 = pneg %p217
        %p308 = pneg %p214
        %s309 = sand.u32 %s204, 1
        %s310 = scalar_lea.sflag [#allocation4], %s309
        %s311 = sand.u32 %s204, 1
        %s312 = smul.addr %s311, 16
        %s313 = scalar_lea.vmem [#allocation5], %s312
        %p314 = scmp.lt.s32.totalorder %s23, 1
        %s315 = scalar_select %p314, %s23, 1
        %s316 = smul.addr %s315, 2
        %s317 = smul.addr %s316, 4
        %s318 = scalar_lea.vmem %s0, %s317
        %v320 = vld [vmem:[%s318] sm:$0xff]
        %v321 = vld [vmem:[#allocation2] sm:$0xff]
        %v322 = vld [vmem:[#allocation2 + $0x8] sm:$0xff]
        %v323 = vld [vmem:[#allocation2 + $0x10] sm:$0xff]
        %v324 = vld [vmem:[#allocation2 + $0x18] sm:$0xff]
        %v325 = vld [vmem:[#allocation2 + $0x20] sm:$0xff]
        %v326 = vld [vmem:[#allocation2 + $0x28] sm:$0xff]
        %v327 = vld [vmem:[#allocation2 + $0x30] sm:$0xff]
        %v328 = vld [vmem:[#allocation2 + $0x38] sm:$0xff]
        %v329 = vld [vmem:[#allocation2 + $0x40] sm:$0xff]
        %v330 = vld [vmem:[#allocation2 + $0x48] sm:$0xff]
        %v331 = vld [vmem:[#allocation2 + $0x50] sm:$0xff]
        %v332 = vld [vmem:[#allocation2 + $0x58] sm:$0xff]
        %v333 = vld [vmem:[#allocation2 + $0x60] sm:$0xff]
        %v334 = vld [vmem:[#allocation2 + $0x68] sm:$0xff]
        %v335 = vld [vmem:[#allocation2 + $0x70] sm:$0xff]
        %v336 = vld [vmem:[#allocation2 + $0x78] sm:$0xff]
        %v337 = vld [vmem:[#allocation2 + $0x80] sm:$0xff]
        %v338 = vld [vmem:[#allocation2 + $0x88] sm:$0xff]
        %v339 = vld [vmem:[%s2] sm:$0xf]
        %v340 = vld [vmem:[%s3] sm:$0xff]
        %v341 = vld [vmem:[%s4] sm:$0x3]
        %v342 = vld [vmem:[%s5] sm:$0xf]
        %v343 = vld [vmem:[%s6] sm:$0xf]
        %v344 = vld [vmem:[%s7] sm:$0xff]
        %v346 = vcombine.high %v320, %v320
        %v348 = vpack.c.bf16 %v320, %v320
        %v349 = vpack.c.bf16 %v346, %v346
        %351 = vset.pattern.permute.xlu0 0
        %352 = vperm.xlu0 %351, %v340
        %v353 = vpop.permute.xlu0 %352
        %vm355 = vcmask 31744
        %v357 = vsel %vm355, %v339, 0
        %vm359 = vcmask 1041408
        %v361 = vsel %vm359, %v348, 0
        %v364 = vsel %vm359, %v349, 0
        %366 = vmatprep.subr.bf16.mxu0 0
        %367 = vmatpush1.bf16.msra.mxu0 0
        %368 = vmatprep.subr.bf16.mxu0 0
        %369 = vmatpush1.bf16.msra.mxu0 0
        %370 = vmatprep.subr.bf16.mxu0 0
        %371 = vmatpush1.bf16.msra.mxu0 0
        %372 = vmatprep.subr.bf16.mxu0 0
        %373 = vmatpush1.bf16.msra.mxu0 0
        %374 = vmatprep.subr.bf16.mxu0 0
        %375 = vmatpush1.bf16.msra.mxu0 0
        %376 = vmatprep.subr.bf16.mxu0 0
        %377 = vmatpush1.bf16.msra.mxu0 0
        %378 = vmatprep.subr.bf16.mxu0 0
        %379 = vmatpush1.bf16.msra.mxu0 0
        %380 = vmatprep.subr.bf16.mxu0 %v364
        %381 = vmatpush1.bf16.msra.mxu0 %v361
        %382 = vmatprep.subr.bf16.mxu0 0
        %383 = vmatpush2.bf16.msra.mxu0 0
        %384 = vmatprep.subr.bf16.mxu0 0
        %385 = vmatpush2.bf16.msra.mxu0 0
        %386 = vmatprep.subr.bf16.mxu0 0
        %387 = vmatpush2.bf16.msra.mxu0 0
        %388 = vmatprep.subr.bf16.mxu0 0
        %389 = vmatpush2.bf16.msra.mxu0 0
        %390 = vmatprep.subr.bf16.mxu0 0
        %391 = vmatpush2.bf16.msra.mxu0 0
        %392 = vmatprep.subr.bf16.mxu0 0
        %393 = vmatpush2.bf16.msra.mxu0 0
        %394 = vmatprep.subr.bf16.mxu0 0
        %395 = vmatpush2.bf16.msra.mxu0 0
        %396 = vmatprep.subr.bf16.mxu0 0
        %397 = vmatpush2.bf16.msra.mxu0 0
        %398 = vmatprep.mubr.bf16.mxu0 0
        %399 = vmatmul.mubr.bf16.gmra.mxu0 %v357
        %v400 = vpop.f32.mrf.mxu0
        %v401 = vadd.f32 %v353, %v400
        %v402 = vpop.f32.mrf.mxu0
        %v403 = vadd.f32 %v353, %v402
        %v404 = vpop.f32.mrf.mxu0
        %v405 = vpop.f32.mrf.mxu0
        %406 = vdwg.mxu0
        %v407 = vmax.f32 %v401, 0.0
        %v408 = vmax.f32 %v403, 0.0
        %409 = vrot.lane.b32.xlu0 %v407, 17
        %v410 = vpop.permute.xlu0 %409
        %411 = vrot.lane.b32.xlu0 %v408, 17
        %v412 = vpop.permute.xlu0 %411
        %v413 = vlaneseq
        %v414 = vand.u32 %v413, 127
        %vm415 = vcmp.lt.s32.totalorder %v414, 17
        %v416 = vsel %vm415, %v410, %v412
        %v417 = vsel %vm415, %v412, %v410
        %418 = vrot.lane.b32.xlu0 %v407, 16
        %v419 = vpop.permute.xlu0 %418
        %420 = vrot.lane.b32.xlu0 %v408, 16
        %v421 = vpop.permute.xlu0 %420
        %vm422 = vcmp.lt.s32.totalorder %v414, 16
        %v423 = vsel %vm422, %v419, %v421
        %v424 = vsel %vm422, %v421, %v419
        %425 = vrot.lane.b32.xlu0 %v407, 15
        %v426 = vpop.permute.xlu0 %425
        %427 = vrot.lane.b32.xlu0 %v408, 15
        %v428 = vpop.permute.xlu0 %427
        %vm429 = vcmp.lt.s32.totalorder %v414, 15
        %v430 = vsel %vm429, %v426, %v428
        %v431 = vsel %vm429, %v428, %v426
        %432 = vrot.lane.b32.xlu0 %v407, 1
        %v433 = vpop.permute.xlu0 %432
        %434 = vrot.lane.b32.xlu0 %v408, 1
        %v435 = vpop.permute.xlu0 %434
        %vm436 = vcmp.lt.s32.totalorder %v414, 1
        %v437 = vsel %vm436, %v433, %v435
        %v438 = vsel %vm436, %v435, %v433
        %439 = vrot.lane.b32.xlu0 %v407, 127
        %v440 = vpop.permute.xlu0 %439
        %441 = vrot.lane.b32.xlu0 %v408, 127
        %v442 = vpop.permute.xlu0 %441
        %vm443 = vcmp.lt.s32.totalorder %v414, 127
        %v444 = vsel %vm443, %v440, %v442
        %v445 = vsel %vm443, %v442, %v440
        %446 = vrot.lane.b32.xlu0 %v407, 113
        %v447 = vpop.permute.xlu0 %446
        %448 = vrot.lane.b32.xlu0 %v408, 113
        %v449 = vpop.permute.xlu0 %448
        %vm450 = vcmp.lt.s32.totalorder %v414, 113
        %v451 = vsel %vm450, %v447, %v449
        %v452 = vsel %vm450, %v449, %v447
        %453 = vrot.lane.b32.xlu0 %v407, 112
        %v454 = vpop.permute.xlu0 %453
        %455 = vrot.lane.b32.xlu0 %v408, 112
        %v456 = vpop.permute.xlu0 %455
        %vm457 = vcmp.lt.s32.totalorder %v414, 112
        %v458 = vsel %vm457, %v454, %v456
        %v459 = vsel %vm457, %v456, %v454
        %460 = vrot.lane.b32.xlu0 %v407, 111
        %v461 = vpop.permute.xlu0 %460
        %462 = vrot.lane.b32.xlu0 %v408, 111
        %v463 = vpop.permute.xlu0 %462
        %vm464 = vcmp.lt.s32.totalorder %v414, 111
        %v465 = vsel %vm464, %v461, %v463
        %v466 = vsel %vm464, %v463, %v461
        %v467 = vmul.f32 %v417, %v321
        %v468 = vmul.f32 %v416, %v322
        %v469 = vmul.f32 %v424, %v323
        %v470 = vmul.f32 %v423, %v324
        %v471 = vmul.f32 %v431, %v325
        %v472 = vmul.f32 %v430, %v326
        %v473 = vmul.f32 %v438, %v327
        %v474 = vmul.f32 %v437, %v328
        %v475 = vmul.f32 %v407, %v329
        %v476 = vmul.f32 %v408, %v330
        %v477 = vmul.f32 %v444, %v331
        %v478 = vmul.f32 %v445, %v332
        %v479 = vmul.f32 %v451, %v333
        %v480 = vmul.f32 %v452, %v334
        %v481 = vmul.f32 %v458, %v335
        %v482 = vmul.f32 %v459, %v336
        %v483 = vmul.f32 %v465, %v337
        %v484 = vmul.f32 %v466, %v338
        %v485 = vpack.c.bf16 %v469, %v467
        %v486 = vpack.c.bf16 %v470, %v468
        %v487 = vpack.c.bf16 %v473, %v471
        %v488 = vpack.c.bf16 %v474, %v472
        %v489 = vpack.c.bf16 %v477, %v475
        %v490 = vpack.c.bf16 %v478, %v476
        %v491 = vpack.c.bf16 %v481, %v479
        %v492 = vpack.c.bf16 %v482, %v480
        %v493 = vpack.c.bf16 %v483, %v483
        %v494 = vpack.c.bf16 %v484, %v484
        %496 = vset.pattern.permute.xlu0 0
        %497 = vperm.xlu0 %496, %v342
        %v498 = vpop.permute.xlu0 %497
        %vm500 = vcmask 588800
        %v502 = vsel %vm500, %v341, 0
        %vm504 = vcmask 1043456
        %v506 = vsel %vm504, %v493, 0
        %v509 = vsel %vm504, %v494, 0
        %511 = vmatprep.subr.bf16.mxu0 0
        %512 = vmatpush1.bf16.msra.mxu0 0
        %513 = vmatprep.subr.bf16.mxu0 0
        %514 = vmatpush1.bf16.msra.mxu0 0
        %515 = vmatprep.subr.bf16.mxu0 0
        %516 = vmatpush1.bf16.msra.mxu0 0
        %517 = vmatprep.subr.bf16.mxu0 %v509
        %518 = vmatpush1.bf16.msra.mxu0 %v506
        %519 = vmatprep.subr.bf16.mxu0 %v492
        %520 = vmatpush1.bf16.msra.mxu0 %v491
        %521 = vmatprep.subr.bf16.mxu0 %v490
        %522 = vmatpush1.bf16.msra.mxu0 %v489
        %523 = vmatprep.subr.bf16.mxu0 %v488
        %524 = vmatpush1.bf16.msra.mxu0 %v487
        %525 = vmatprep.subr.bf16.mxu0 %v486
        %526 = vmatpush1.bf16.msra.mxu0 %v485
        %527 = vmatprep.subr.bf16.mxu0 0
        %528 = vmatpush2.bf16.msra.mxu0 0
        %529 = vmatprep.subr.bf16.mxu0 0
        %530 = vmatpush2.bf16.msra.mxu0 0
        %531 = vmatprep.subr.bf16.mxu0 0
        %532 = vmatpush2.bf16.msra.mxu0 0
        %533 = vmatprep.subr.bf16.mxu0 0
        %534 = vmatpush2.bf16.msra.mxu0 0
        %535 = vmatprep.subr.bf16.mxu0 0
        %536 = vmatpush2.bf16.msra.mxu0 0
        %537 = vmatprep.subr.bf16.mxu0 0
        %538 = vmatpush2.bf16.msra.mxu0 0
        %539 = vmatprep.subr.bf16.mxu0 0
        %540 = vmatpush2.bf16.msra.mxu0 0
        %541 = vmatprep.subr.bf16.mxu0 0
        %542 = vmatpush2.bf16.msra.mxu0 0
        %543 = vmatprep.mubr.bf16.mxu0 0
        %544 = vmatmul.mubr.bf16.gmra.mxu0 %v502
        %v545 = vpop.f32.mrf.mxu0
        %v546 = vadd.f32 %v498, %v545
        %v547 = vpop.f32.mrf.mxu0
        %v548 = vadd.f32 %v498, %v547
        %v549 = vpop.f32.mrf.mxu0
        %v550 = vpop.f32.mrf.mxu0
        %551 = vdwg.mxu0
        %v552 = vmax.f32 %v546, 0.0
        %v553 = vmax.f32 %v548, 0.0
        %v554 = vpack.c.bf16 %v552, %v552
        %v555 = vpack.c.bf16 %v553, %v553
        %v557 = vsel %vm359, %v554, 0
        %v560 = vsel %vm359, %v555, 0
        %562 = vmatprep.subr.bf16.mxu0 0
        %563 = vmatpush1.bf16.msra.mxu0 0
        %564 = vmatprep.subr.bf16.mxu0 0
        %565 = vmatpush1.bf16.msra.mxu0 0
        %566 = vmatprep.subr.bf16.mxu0 0
        %567 = vmatpush1.bf16.msra.mxu0 0
        %568 = vmatprep.subr.bf16.mxu0 0
        %569 = vmatpush1.bf16.msra.mxu0 0
        %570 = vmatprep.subr.bf16.mxu0 0
        %571 = vmatpush1.bf16.msra.mxu0 0
        %572 = vmatprep.subr.bf16.mxu0 0
        %573 = vmatpush1.bf16.msra.mxu0 0
        %574 = vmatprep.subr.bf16.mxu0 0
        %575 = vmatpush1.bf16.msra.mxu0 0
        %576 = vmatprep.subr.bf16.mxu0 %v560
        %577 = vmatpush1.bf16.msra.mxu0 %v557
        %578 = vmatprep.subr.bf16.mxu0 0
        %579 = vmatpush2.bf16.msra.mxu0 0
        %580 = vmatprep.subr.bf16.mxu0 0
        %581 = vmatpush2.bf16.msra.mxu0 0
        %582 = vmatprep.subr.bf16.mxu0 0
        %583 = vmatpush2.bf16.msra.mxu0 0
        %584 = vmatprep.subr.bf16.mxu0 0
        %585 = vmatpush2.bf16.msra.mxu0 0
        %586 = vmatprep.subr.bf16.mxu0 0
        %587 = vmatpush2.bf16.msra.mxu0 0
        %588 = vmatprep.subr.bf16.mxu0 0
        %589 = vmatpush2.bf16.msra.mxu0 0
        %590 = vmatprep.subr.bf16.mxu0 0
        %591 = vmatpush2.bf16.msra.mxu0 0
        %592 = vmatprep.subr.bf16.mxu0 0
        %593 = vmatpush2.bf16.msra.mxu0 0
        %594 = vmatprep.mubr.bf16.mxu0 0
        %595 = vmatmul.mubr.bf16.gmra.mxu0 %v357
        %v596 = vpop.f32.mrf.mxu0
        %v597 = vadd.f32 %v353, %v596
        %v598 = vpop.f32.mrf.mxu0
        %v599 = vadd.f32 %v353, %v598
        %v600 = vpop.f32.mrf.mxu0
        %v601 = vpop.f32.mrf.mxu0
        %602 = vdwg.mxu0
        %v603 = vmax.f32 %v597, 0.0
        %v604 = vmax.f32 %v599, 0.0
        %605 = vrot.lane.b32.xlu0 %v603, 17
        %v606 = vpop.permute.xlu0 %605
        %607 = vrot.lane.b32.xlu0 %v604, 17
        %v608 = vpop.permute.xlu0 %607
        %v609 = vsel %vm415, %v606, %v608
        %v610 = vsel %vm415, %v608, %v606
        %611 = vrot.lane.b32.xlu0 %v603, 16
        %v612 = vpop.permute.xlu0 %611
        %613 = vrot.lane.b32.xlu0 %v604, 16
        %v614 = vpop.permute.xlu0 %613
        %v615 = vsel %vm422, %v612, %v614
        %v616 = vsel %vm422, %v614, %v612
        %617 = vrot.lane.b32.xlu0 %v603, 15
        %v618 = vpop.permute.xlu0 %617
        %619 = vrot.lane.b32.xlu0 %v604, 15
        %v620 = vpop.permute.xlu0 %619
        %v621 = vsel %vm429, %v618, %v620
        %v622 = vsel %vm429, %v620, %v618
        %623 = vrot.lane.b32.xlu0 %v603, 1
        %v624 = vpop.permute.xlu0 %623
        %625 = vrot.lane.b32.xlu0 %v604, 1
        %v626 = vpop.permute.xlu0 %625
        %v627 = vsel %vm436, %v624, %v626
        %v628 = vsel %vm436, %v626, %v624
        %629 = vrot.lane.b32.xlu0 %v603, 127
        %v630 = vpop.permute.xlu0 %629
        %631 = vrot.lane.b32.xlu0 %v604, 127
        %v632 = vpop.permute.xlu0 %631
        %v633 = vsel %vm443, %v630, %v632
        %v634 = vsel %vm443, %v632, %v630
        %635 = vrot.lane.b32.xlu0 %v603, 113
        %v636 = vpop.permute.xlu0 %635
        %637 = vrot.lane.b32.xlu0 %v604, 113
        %v638 = vpop.permute.xlu0 %637
        %v639 = vsel %vm450, %v636, %v638
        %v640 = vsel %vm450, %v638, %v636
        %641 = vrot.lane.b32.xlu0 %v603, 112
        %v642 = vpop.permute.xlu0 %641
        %643 = vrot.lane.b32.xlu0 %v604, 112
        %v644 = vpop.permute.xlu0 %643
        %v645 = vsel %vm457, %v642, %v644
        %v646 = vsel %vm457, %v644, %v642
        %647 = vrot.lane.b32.xlu0 %v603, 111
        %v648 = vpop.permute.xlu0 %647
        %649 = vrot.lane.b32.xlu0 %v604, 111
        %v650 = vpop.permute.xlu0 %649
        %v651 = vsel %vm464, %v648, %v650
        %v652 = vsel %vm464, %v650, %v648
        %v653 = vmul.f32 %v610, %v321
        %v654 = vmul.f32 %v609, %v322
        %v655 = vmul.f32 %v616, %v323
        %v656 = vmul.f32 %v615, %v324
        %v657 = vmul.f32 %v622, %v325
        %v658 = vmul.f32 %v621, %v326
        %v659 = vmul.f32 %v628, %v327
        %v660 = vmul.f32 %v627, %v328
        %v661 = vmul.f32 %v603, %v329
        %v662 = vmul.f32 %v604, %v330
        %v663 = vmul.f32 %v633, %v331
        %v664 = vmul.f32 %v634, %v332
        %v665 = vmul.f32 %v639, %v333
        %v666 = vmul.f32 %v640, %v334
        %v667 = vmul.f32 %v645, %v335
        %v668 = vmul.f32 %v646, %v336
        %v669 = vmul.f32 %v651, %v337
        %v670 = vmul.f32 %v652, %v338
        %v671 = vpack.c.bf16 %v655, %v653
        %v672 = vpack.c.bf16 %v656, %v654
        %v673 = vpack.c.bf16 %v659, %v657
        %v674 = vpack.c.bf16 %v660, %v658
        %v675 = vpack.c.bf16 %v663, %v661
        %v676 = vpack.c.bf16 %v664, %v662
        %v677 = vpack.c.bf16 %v667, %v665
        %v678 = vpack.c.bf16 %v668, %v666
        %v679 = vpack.c.bf16 %v669, %v669
        %v680 = vpack.c.bf16 %v670, %v670
        %v682 = vsel %vm504, %v679, 0
        %v685 = vsel %vm504, %v680, 0
        %687 = vmatprep.subr.bf16.mxu0 0
        %688 = vmatpush1.bf16.msra.mxu0 0
        %689 = vmatprep.subr.bf16.mxu0 0
        %690 = vmatpush1.bf16.msra.mxu0 0
        %691 = vmatprep.subr.bf16.mxu0 0
        %692 = vmatpush1.bf16.msra.mxu0 0
        %693 = vmatprep.subr.bf16.mxu0 %v685
        %694 = vmatpush1.bf16.msra.mxu0 %v682
        %695 = vmatprep.subr.bf16.mxu0 %v678
        %696 = vmatpush1.bf16.msra.mxu0 %v677
        %697 = vmatprep.subr.bf16.mxu0 %v676
        %698 = vmatpush1.bf16.msra.mxu0 %v675
        %699 = vmatprep.subr.bf16.mxu0 %v674
        %700 = vmatpush1.bf16.msra.mxu0 %v673
        %701 = vmatprep.subr.bf16.mxu0 %v672
        %702 = vmatpush1.bf16.msra.mxu0 %v671
        %703 = vmatprep.subr.bf16.mxu0 0
        %704 = vmatpush2.bf16.msra.mxu0 0
        %705 = vmatprep.subr.bf16.mxu0 0
        %706 = vmatpush2.bf16.msra.mxu0 0
        %707 = vmatprep.subr.bf16.mxu0 0
        %708 = vmatpush2.bf16.msra.mxu0 0
        %709 = vmatprep.subr.bf16.mxu0 0
        %710 = vmatpush2.bf16.msra.mxu0 0
        %711 = vmatprep.subr.bf16.mxu0 0
        %712 = vmatpush2.bf16.msra.mxu0 0
        %713 = vmatprep.subr.bf16.mxu0 0
        %714 = vmatpush2.bf16.msra.mxu0 0
        %715 = vmatprep.subr.bf16.mxu0 0
        %716 = vmatpush2.bf16.msra.mxu0 0
        %717 = vmatprep.subr.bf16.mxu0 0
        %718 = vmatpush2.bf16.msra.mxu0 0
        %719 = vmatprep.mubr.bf16.mxu0 0
        %720 = vmatmul.mubr.bf16.gmra.mxu0 %v502
        %v721 = vpop.f32.mrf.mxu0
        %v722 = vadd.f32 %v498, %v721
        %v723 = vpop.f32.mrf.mxu0
        %v724 = vadd.f32 %v498, %v723
        %v725 = vpop.f32.mrf.mxu0
        %v726 = vpop.f32.mrf.mxu0
        %727 = vdwg.mxu0
        %v728 = vmax.f32 %v722, 0.0
        %v729 = vmax.f32 %v724, 0.0
        %v730 = vpack.c.bf16 %v728, %v728
        %v731 = vpack.c.bf16 %v729, %v729
        %733 = vset.pattern.permute.xlu0 0
        %734 = vperm.xlu0 %733, %v344
        %v735 = vpop.permute.xlu0 %734
        %v738 = vsel %vm355, %v343, 0
        %v741 = vsel %vm359, %v730, 0
        %v744 = vsel %vm359, %v731, 0
        %746 = vmatprep.subr.bf16.mxu0 0
        %747 = vmatpush1.bf16.msra.mxu0 0
        %748 = vmatprep.subr.bf16.mxu0 0
        %749 = vmatpush1.bf16.msra.mxu0 0
        %750 = vmatprep.subr.bf16.mxu0 0
        %751 = vmatpush1.bf16.msra.mxu0 0
        %752 = vmatprep.subr.bf16.mxu0 0
        %753 = vmatpush1.bf16.msra.mxu0 0
        %754 = vmatprep.subr.bf16.mxu0 0
        %755 = vmatpush1.bf16.msra.mxu0 0
        %756 = vmatprep.subr.bf16.mxu0 0
        %757 = vmatpush1.bf16.msra.mxu0 0
        %758 = vmatprep.subr.bf16.mxu0 0
        %759 = vmatpush1.bf16.msra.mxu0 0
        %760 = vmatprep.subr.bf16.mxu0 %v744
        %761 = vmatpush1.bf16.msra.mxu0 %v741
        %762 = vmatprep.subr.bf16.mxu0 0
        %763 = vmatpush2.bf16.msra.mxu0 0
        %764 = vmatprep.subr.bf16.mxu0 0
        %765 = vmatpush2.bf16.msra.mxu0 0
        %766 = vmatprep.subr.bf16.mxu0 0
        %767 = vmatpush2.bf16.msra.mxu0 0
        %768 = vmatprep.subr.bf16.mxu0 0
        %769 = vmatpush2.bf16.msra.mxu0 0
        %770 = vmatprep.subr.bf16.mxu0 0
        %771 = vmatpush2.bf16.msra.mxu0 0
        %772 = vmatprep.subr.bf16.mxu0 0
        %773 = vmatpush2.bf16.msra.mxu0 0
        %774 = vmatprep.subr.bf16.mxu0 0
        %775 = vmatpush2.bf16.msra.mxu0 0
        %776 = vmatprep.subr.bf16.mxu0 0
        %777 = vmatpush2.bf16.msra.mxu0 0
        %778 = vmatprep.mubr.bf16.mxu0 0
        %779 = vmatmul.mubr.bf16.gmra.mxu0 %v738
        %v780 = vpop.f32.mrf.mxu0
        %v781 = vadd.f32 %v735, %v780
        %v782 = vpop.f32.mrf.mxu0
        %v783 = vadd.f32 %v735, %v782
        %v784 = vpop.f32.mrf.mxu0
        %v785 = vpop.f32.mrf.mxu0
        %786 = vdwg.mxu0
        %787 = vst [vmem:[%s313] sm:$0xff] %v781
        %788 = vst [vmem:[%s313 + $0x8] sm:$0xff] %v783
        %s789 = sand.u32 %s204, 1
        %s790 = scalar_lea.sflag [#allocation4], %s789
        %s791 = sand.u32 %s204, 1
        %s792 = smul.addr %s791, 16
        %s793 = scalar_lea.vmem [#allocation5], %s792
        // Predicated region
        $region57: #{tpu_custom_call.1} parent=51 // pred_check
          %p794 = pneg %p214
        $region58: #{tpu_custom_call.1} parent=51 // pred_check_branch
          %796 = sbr.rel (%p794) target = $region60
        $region59: #{tpu_custom_call.1} parent=51 // pred_region
          %s798 = ssub.s32 256, 256
          %799 = vsyncadd %s790, %s798
          %s800 = smul.addr %s23, 2
          %s801 = smul.addr %s800, 128
          %s802 = scalar_lea.hbm %s8, %s801
          %s804 = sshll.u32 %s793, 4
          %s805 = int_to_ptr.vmem [resolvable:$true] %s804
          %807 = dma.vmem_to_hbm [thread:$0]  %s805, 256, %s802, %s790
        $region60: #{tpu_custom_call.1} parent=51 // pred_fallthru
          _
      $region52: #{tpu_custom_call.1} parent=5 // pred_fallthru
        _
      %p808 = scmp.le.s32.totalorder 2, %s18
      // Predicated region
      $region61: #{tpu_custom_call.1} parent=5 // pred_check
        %p809 = pneg %p808
      $region62: #{tpu_custom_call.1} parent=5 // pred_check_branch
        %811 = sbr.rel (%p809) target = $region64
      $region63: #{tpu_custom_call.1} parent=5 // pred_region
        %s812 = ssub.s32 %s18, 2
        // Predicated region
        $region65: #{tpu_custom_call.1} parent=63 // pred_check
          %p813 = pneg %p220
        $region66: #{tpu_custom_call.1} parent=63 // pred_check_branch
          %815 = sbr.rel (%p813) target = $region68
        $region67: #{tpu_custom_call.1} parent=63 // pred_region
          %s816 = sand.u32 %s205, 1
          %s817 = scalar_lea.sflag [#allocation4], %s816
          %s818 = sand.u32 %s205, 1
          %s819 = smul.addr %s818, 16
          %s820 = scalar_lea.vmem [#allocation5], %s819
          %821 = dma.done %s817, 256
        $region68: #{tpu_custom_call.1} parent=63 // pred_fallthru
          _
      $region64: #{tpu_custom_call.1} parent=5 // pred_fallthru
        _
    $region6: #{tpu_custom_call.1} parent=1 // loop_footer
      %s22 = sadd.s32 1, %s18
    $region7: #{tpu_custom_call.1} parent=1 // loop_footer_branch
      %17 = sbr.rel target = $region3
    $region8: #{tpu_custom_call.1} parent=1 // loop_exit
      _
    %822 = vsyncpa [#allocation3], 1
    %s823 = scalar_lea.sflag [#allocation3], 1
    %824 = vsyncpa %s823, 1
    %825 = vsyncpa [#allocation4], 1
    %s826 = scalar_lea.sflag [#allocation4], 1
    %827 = vsyncpa %s826, 1

</llo_original>
